<compile_context>
chip_gen: v6e
topology: v6e:2x2x1
jax: 0.10.0
libtpu: 0.0.40
codegen_flags: <defaults>
</compile_context>

<pallas_src>
import jax
import jax.numpy as jnp
from jax.experimental import pallas as pl
from jax.experimental.pallas import tpu as pltpu


def _alias_passthrough_kernel(dec_hbm_ref, out_hbm_ref, flag_smem):
    # `out` aliases `dec` (input_output_aliases={0: 0}): the output HBM buffer
    # *is* the input buffer, so there is nothing to move and nothing to
    # compute.  A single SMEM scalar store keeps the kernel body trivially
    # non-empty (negligible cost, guarantees a well-formed Mosaic function).
    del dec_hbm_ref, out_hbm_ref
    flag_smem[0] = jnp.int32(1)


def _dma_copy_kernel(dec_hbm_ref, out_hbm_ref, sem):
    # Materializing path: one HBM->HBM DMA.  No VMEM residency, no vld/vst
    # bundles, no BlockSpec tiling -> works for any (B, C, H, W) shape and
    # any VMEM size (v5e/v6e/v7x alike).
    copy = pltpu.make_async_copy(dec_hbm_ref, out_hbm_ref, sem)
    copy.start()
    copy.wait()


def attention_forward(input_enc, input_dec, *, materialize=False):
    """Pallas equivalent of the base Attention.forward: returns input_dec.

    input_enc: (B, C_enc, H, W)  -- unused by the base Attention module
    input_dec: (B, C_dec, H, W)
    materialize: if True, return a freshly allocated copy of input_dec
                 (single HBM->HBM DMA) instead of aliasing its buffer.
    """
    del input_enc  # base Attention ignores the encoder features entirely
    out_shape = jax.ShapeDtypeStruct(input_dec.shape, input_dec.dtype)

    if not materialize:
        # Zero-data-movement path: output aliases the input HBM buffer.
        return pl.pallas_call(
            _alias_passthrough_kernel,
            out_shape=out_shape,
            in_specs=[pl.BlockSpec(memory_space=pl.ANY)],
            out_specs=pl.BlockSpec(memory_space=pl.ANY),
            scratch_shapes=[pltpu.SMEM((1,), jnp.int32)],
            input_output_aliases={0: 0},
        )(input_dec)

    # Fresh-buffer path: pure DMA copy HBM -> HBM.
    return pl.pallas_call(
        _dma_copy_kernel,
        out_shape=out_shape,
        in_specs=[pl.BlockSpec(memory_space=pl.ANY)],
        out_specs=pl.BlockSpec(memory_space=pl.ANY),
        scratch_shapes=[pltpu.SemaphoreType.DMA],
    )(input_dec)


class AttentionPallas:
    """Mirror of the PyTorch `Attention` module (no parameters)."""

    def __init__(self, channels_enc, channels_dec):
        self.channels_enc = channels_enc
        self.channels_dec = channels_dec

    def __call__(self, input_enc, input_dec):
        return attention_forward(input_enc, input_dec)


if __name__ == "__main__":
    key = jax.random.PRNGKey(0)
    k_enc, k_dec = jax.random.split(key)

    B, C_enc, C_dec, H, W = 2, 4, 4, 16, 16
    input_enc = jax.random.normal(k_enc, (B, C_enc, H, W), dtype=jnp.float32)
    input_dec = jax.random.normal(k_dec, (B, C_dec, H, W), dtype=jnp.float32)

    attn = AttentionPallas(C_enc, C_dec)

    # Default (aliased, zero-copy) path.
    out = jax.block_until_ready(attn(input_enc, input_dec))
    assert out.shape == input_dec.shape
    assert out.dtype == input_dec.dtype
    assert bool(jnp.allclose(out, input_dec))

    # Materializing (HBM->HBM DMA) path.
    out_copy = jax.block_until_ready(
        attention_forward(input_enc, input_dec, materialize=True)
    )
    assert out_copy.shape == input_dec.shape
    assert out_copy.dtype == input_dec.dtype
    assert bool(jnp.allclose(out_copy, input_dec))

    print("KERNEL_OK")
</pallas_src>

<mosaic_0001>
module attributes {stable_mosaic.version = 11 : i64} {
  func.func @_alias_passthrough_kernel(%arg0: memref<2x4x16x16xf32, #tpu.memory_space<any>>, %arg1: memref<2x4x16x16xf32, #tpu.memory_space<any>>, %arg2: memref<1xi32, #tpu.memory_space<smem>>) attributes {dimension_semantics = [], scalar_prefetch = 0 : i64, scratch_operands = 1 : i64, tpu.core_type = #tpu.core_type<tc>} {
    %c1_i32 = arith.constant 1 : i32
    %c0 = arith.constant 0 : index
    %0 = memref.load %arg2[%c0] : memref<1xi32, #tpu.memory_space<smem>>
    memref.store %c1_i32, %arg2[%c0] : memref<1xi32, #tpu.memory_space<smem>>
    return
  }
}

</mosaic_0001>

<llo_original>
// kernel: tpu_custom_call.1
$region0: #{tpu_custom_call.1}
  #allocation0 [shape = 'u32[]', space=smem, size = 0x4, offset = 0x4, fixed_abs, tag = 'smem constant byte address 0x4 - core index']
  #allocation1 [shape = 'u32[144,128]{1,0:T(1,128)}', space=vmem, size = 0x12000, scoped, tag = 'internal scratch']
  #allocation2 [shape = 's32[1]{0:T(128)}', space=smem, size = 0x200, scoped, tag = 'scratch operand']
  %s0 = inlined_call_operand.hbm [shape: f32[2,4,16,16], index: 0, kind: input, shape index: {}, may-alias: {0,1}]
  %s1 = inlined_call_operand.hbm [shape: f32[2,4,16,16], index: 1, kind: output, shape index: {}, may-alias: {0,1}]
  %s2 = sld [smem:[#allocation0]]
  $region2: #{tpu_custom_call.1} parent=0
    _
  %s4 = ssub.s32 1, %s2
  %s5 = scalar_select 0, %s4, %s2
  %s6 = scalar_lea.smem [#allocation2], 0
  %7 = sst [smem:[%s6]] 1

</llo_original>
